<compile_context>
chip_gen: v5e
topology: v5e:2x2
jax: 0.10.0
libtpu: 0.0.40
codegen_flags: <defaults>
</compile_context>

<pallas_src>
import functools

import numpy as np
import jax
import jax.numpy as jnp
from jax import lax
from jax.experimental import pallas as pl
from jax.experimental.pallas import tpu as pltpu


def _default_vmem_limit():
    # ~half of physical VMEM, clamped: v5e/v6e (128 MiB) -> 64 MiB, v7x (64 MiB) -> 32 MiB.
    try:
        cap = pltpu.get_tpu_info().vmem_capacity_bytes
        return int(min(max(cap // 2, 32 * 1024 * 1024), 96 * 1024 * 1024))
    except Exception:
        return 32 * 1024 * 1024


_VMEM_LIMIT = _default_vmem_limit()
_TC_CAP = 256          # soft cap on time-chunk length (keeps >=2 chunks pipelined for long S)
_UNROLL = 8            # inner time-loop unroll factor


def _cdiv(a, b):
    return -(-a // b)


# --------------------- fused projection + recurrence kernel -------------------- #
def _rnn_fused_kernel(seq_len, has_pad, unroll,
                      x_ref, wp_ref, bp_ref, wbd_ref, wo_ref,
                      out_ref, state_ref, h_ref):
    """One time-chunk of the fused RNN.

    x_ref     : (tc, B, In)  raw input chunk (time-major)
    wp_ref    : (In, D)      input-projection weight     (resident)
    bp_ref    : (1, D)       input-projection bias       (resident)
    wbd_ref   : (D, D)       block-diagonal state weight (heads folded, resident)
    wo_ref    : (D, Out)     output-projection weight    (resident)
    out_ref   : (tc, B, Out) output chunk (time-major)
    state_ref : (B, D)       final hidden state (resident output block)
    h_ref     : (B, D) f32   carried hidden state scratch (persists across chunks)
    """
    c = pl.program_id(0)

    @pl.when(c == 0)
    def _():
        h_ref[...] = jnp.zeros_like(h_ref)          # h_0 = 0 (input_state=None)

    tc = x_ref.shape[0]
    # Hoist all weight loads out of the serial time loop.
    wp = wp_ref[...].astype(jnp.float32)
    bp = bp_ref[...].astype(jnp.float32)
    w = wbd_ref[...].astype(jnp.float32)
    wo = wo_ref[...].astype(jnp.float32)
    chunk_start = c * tc

    def step(t, h):
        # fused input projection for this time step: (B, In) @ (In, D) + bias
        y_t = jnp.dot(x_ref[t].astype(jnp.float32), wp,
                      preferred_element_type=jnp.float32) + bp
        # recurrence
        h_new = jnp.tanh(jnp.dot(h, w, preferred_element_type=jnp.float32) + y_t)
        if has_pad:
            # mask padded tail steps so the carried / final state stays exact
            h_new = jnp.where(chunk_start + t < seq_len, h_new, h)
        # fused output projection: (B, D) @ (D, Out)
        out_ref[t] = jnp.dot(h_new, wo,
                             preferred_element_type=jnp.float32).astype(out_ref.dtype)
        return h_new

    h = lax.fori_loop(0, tc, step, h_ref[...], unroll=unroll)
    h_ref[...] = h
    state_ref[...] = h.astype(state_ref.dtype)


def _pick_time_chunk(S, B, In, D, Out, itemsize):
    """Balanced, VMEM-aware time-chunk length (minimizes tail padding)."""
    # Resident buffers (double-buffered BlockSpecs) + carried-state scratch.
    fixed = 2 * (In * D + D + D * D + D * Out + B * D) * itemsize + B * D * 4
    budget = max(_VMEM_LIMIT - fixed - (4 << 20), 1 << 20)
    # Per time step of chunk: x chunk and out chunk, each double-buffered.
    per_step = 2 * B * (In + Out) * itemsize
    cap = int(max(1, min(S, _TC_CAP, budget // max(per_step, 1))))
    n_chunks = _cdiv(S, cap)
    return _cdiv(S, n_chunks)     # balanced: at most n_chunks - 1 padded steps total


def fold_state_weight(Ws):
    """(num_heads, Hd, Hd) per-head weights -> (D, D) block-diagonal weight.

    Precomputed ONCE outside the jitted forward (not rebuilt per call).
    """
    num_heads, Hd, _ = Ws.shape
    D = num_heads * Hd
    w_bd = jnp.zeros((num_heads, Hd, num_heads, Hd), Ws.dtype)
    w_bd = w_bd.at[jnp.arange(num_heads), :, jnp.arange(num_heads), :].set(Ws)
    return w_bd.reshape(D, D)


# --------------------------------- Full forward ------------------------------ #
@jax.jit
def rnn_forward(x, Wp, bp, w_bd, Wo):
    """x: (B, S, input_size) -> (out: (B, S, output_size), state: (B, state_size))."""
    B, S, In = x.shape
    D = Wp.shape[1]
    Out = Wo.shape[1]

    # Time-major layout so the chunked BlockSpecs have full-extent trailing dims
    # (no (8,128) divisibility constraints on B / In / Out).
    # TODO(synk): fold these two small transposes into the index_maps once the
    #             chunk length can be forced to a multiple of 8 cheaply.
    x_tm = jnp.swapaxes(x, 0, 1)                      # (S, B, In)

    tc = _pick_time_chunk(S, B, In, D, Out, x.dtype.itemsize)
    n_chunks = _cdiv(S, tc)
    Sp = n_chunks * tc
    if Sp != S:
        x_tm = jnp.pad(x_tm, ((0, Sp - S), (0, 0), (0, 0)))

    kernel = functools.partial(_rnn_fused_kernel, S, Sp != S, min(_UNROLL, tc))

    out_tm, state = pl.pallas_call(
        kernel,
        out_shape=(jax.ShapeDtypeStruct((Sp, B, Out), x.dtype),
                   jax.ShapeDtypeStruct((B, D), x.dtype)),
        grid=(n_chunks,),
        in_specs=[
            pl.BlockSpec((tc, B, In), lambda c: (c, 0, 0)),   # x chunk (pipelined)
            pl.BlockSpec((In, D), lambda c: (0, 0)),          # Wp  (resident)
            pl.BlockSpec((1, D), lambda c: (0, 0)),           # bp  (resident)
            pl.BlockSpec((D, D), lambda c: (0, 0)),           # w_bd (resident)
            pl.BlockSpec((D, Out), lambda c: (0, 0)),         # Wo  (resident)
        ],
        out_specs=(
            pl.BlockSpec((tc, B, Out), lambda c: (c, 0, 0)),  # out chunk (pipelined)
            pl.BlockSpec((B, D), lambda c: (0, 0)),           # final state (resident)
        ),
        scratch_shapes=[pltpu.VMEM((B, D), jnp.float32)],     # carried hidden state
        compiler_params=pltpu.CompilerParams(
            dimension_semantics=("arbitrary",),               # time axis carries state
            vmem_limit_bytes=_VMEM_LIMIT,
        ),
    )(x_tm, Wp, bp.reshape(1, D), w_bd, Wo)

    out = jnp.swapaxes(out_tm[:S], 0, 1)                      # (B, S, output_size)
    return out, state


# ------------------------------ Pure-JAX reference --------------------------- #
def rnn_forward_ref(x, Wp, bp, Ws, Wo, num_heads):
    B, S, In = x.shape
    state_size = Wp.shape[1]
    Hd = state_size // num_heads
    y = (x.reshape(B * S, In) @ Wp + bp).reshape(B, S, num_heads, Hd)
    h0 = jnp.zeros((B, num_heads, Hd), x.dtype)

    def step(h, yt):
        h = jnp.tanh(jnp.einsum("bnh,nhk->bnk", h, Ws) + yt)
        return h, h

    _, hs = lax.scan(step, h0, jnp.swapaxes(y, 0, 1))   # (S, B, N, Hd)
    hs = jnp.swapaxes(hs, 0, 1)                          # (B, S, N, Hd)
    final_state = hs[:, -1].reshape(B, state_size)
    out = (hs.reshape(B * S, state_size) @ Wo).reshape(B, S, Wo.shape[1])
    return out, final_state


# ------------------------------------- Main ---------------------------------- #
def _run_case(batch, seq, input_size, state_size, output_size, num_heads, seed):
    head_dim = state_size // num_heads
    key = jax.random.PRNGKey(seed)
    kx, kp, kb, ks, ko = jax.random.split(key, 5)

    x = jax.random.normal(kx, (batch, seq, input_size), jnp.float32)
    # input_projection: nn.Linear(input_size, state_size, bias=True), stored transposed
    Wp = jax.random.normal(kp, (input_size, state_size), jnp.float32) * 0.05
    bp = jax.random.normal(kb, (state_size,), jnp.float32) * 0.05
    # state_weight: nn.init.normal_ (std=1), shape (num_heads, head_dim, head_dim)
    Ws = jax.random.normal(ks, (num_heads, head_dim, head_dim), jnp.float32)
    # output_projection: nn.Linear(state_size, output_size, bias=False), transposed
    Wo = jax.random.normal(ko, (state_size, output_size), jnp.float32) * 0.05

    # Block-diagonal fold of the per-head state weight, computed once outside jit.
    w_bd = fold_state_weight(Ws)

    out, state = rnn_forward(x, Wp, bp, w_bd, Wo)
    jax.block_until_ready((out, state))

    out_ref, state_ref = rnn_forward_ref(x, Wp, bp, Ws, Wo, num_heads)
    assert out.shape == (batch, seq, output_size)
    assert state.shape == (batch, state_size)
    np.testing.assert_allclose(np.asarray(out), np.asarray(out_ref),
                               rtol=1e-2, atol=1e-2)
    np.testing.assert_allclose(np.asarray(state), np.asarray(state_ref),
                               rtol=1e-2, atol=1e-2)


if __name__ == "__main__":
    # Small shapes consistent with the module.
    _run_case(batch=2, seq=8, input_size=16, state_size=32, output_size=16,
              num_heads=2, seed=0)
    # Multi-chunk recurrence with balanced chunks (2 x 150, zero tail padding).
    _run_case(batch=2, seq=300, input_size=48, state_size=128, output_size=40,
              num_heads=4, seed=1)
    # Multi-chunk with a masked padded tail step (2 x 154 covering 307).
    _run_case(batch=2, seq=307, input_size=48, state_size=128, output_size=40,
              num_heads=4, seed=2)
    print("KERNEL_OK")
</pallas_src>

<mosaic_0001>
module attributes {stable_mosaic.version = 11 : i64} {
  func.func @_rnn_fused_kernel(%arg0: i32, %arg1: memref<8x2x16xf32, #tpu.memory_space<vmem>>, %arg2: memref<16x32xf32, #tpu.memory_space<vmem>>, %arg3: memref<1x32xf32, #tpu.memory_space<vmem>>, %arg4: memref<32x32xf32, #tpu.memory_space<vmem>>, %arg5: memref<32x16xf32, #tpu.memory_space<vmem>>, %arg6: memref<8x2x16xf32, #tpu.memory_space<vmem>>, %arg7: memref<2x32xf32, #tpu.memory_space<vmem>>, %arg8: memref<2x32xf32, #tpu.memory_space<vmem>>) attributes {dimension_semantics = [#tpu.dimension_semantics<arbitrary>], iteration_bounds = array<i64: 1>, scalar_prefetch = 0 : i64, scratch_operands = 1 : i64, tpu.core_type = #tpu.core_type<tc>, window_params = [{transform_indices = @transform_0, window_bounds = array<i64: 8, 2, 16>}, {pipeline_mode = #tpu.pipeline_mode<synchronous>, transform_indices = @transform_1, window_bounds = array<i64: 16, 32>}, {pipeline_mode = #tpu.pipeline_mode<synchronous>, transform_indices = @transform_2, window_bounds = array<i64: 1, 32>}, {pipeline_mode = #tpu.pipeline_mode<synchronous>, transform_indices = @transform_3, window_bounds = array<i64: 32, 32>}, {pipeline_mode = #tpu.pipeline_mode<synchronous>, transform_indices = @transform_4, window_bounds = array<i64: 32, 16>}, {transform_indices = @transform_5, window_bounds = array<i64: 8, 2, 16>}, {pipeline_mode = #tpu.pipeline_mode<synchronous>, transform_indices = @transform_6, window_bounds = array<i64: 2, 32>}]} {
    %c0_i32 = arith.constant 0 : i32
    %0 = arith.cmpi eq, %arg0, %c0_i32 : i32
    %1 = arith.extui %0 : i1 to i32
    %c0_i32_0 = arith.constant 0 : i32
    %2 = arith.cmpi ne, %1, %c0_i32_0 : i32
    scf.if %2 {
      %cst_70 = arith.constant 0.000000e+00 : f32
      %122 = vector.broadcast %cst_70 : f32 to vector<2x32xf32>
      %c0_71 = arith.constant 0 : index
      %c0_72 = arith.constant 0 : index
      %123 = vector.load %arg8[%c0_71, %c0_72] : memref<2x32xf32, #tpu.memory_space<vmem>>, vector<2x32xf32>
      tpu.vector_store %arg8[%c0_71, %c0_72], %122 {strides = array<i32>} : memref<2x32xf32, #tpu.memory_space<vmem>>, vector<2x32xf32>,
    } else {
    }
    %c0 = arith.constant 0 : index
    %c0_1 = arith.constant 0 : index
    %3 = vector.load %arg2[%c0, %c0_1] : memref<16x32xf32, #tpu.memory_space<vmem>>, vector<16x32xf32>
    %c0_2 = arith.constant 0 : index
    %c0_3 = arith.constant 0 : index
    %4 = vector.load %arg3[%c0_2, %c0_3] : memref<1x32xf32, #tpu.memory_space<vmem>>, vector<1x32xf32>
    %c0_4 = arith.constant 0 : index
    %c0_5 = arith.constant 0 : index
    %5 = vector.load %arg4[%c0_4, %c0_5] : memref<32x32xf32, #tpu.memory_space<vmem>>, vector<32x32xf32>
    %c0_6 = arith.constant 0 : index
    %c0_7 = arith.constant 0 : index
    %6 = vector.load %arg5[%c0_6, %c0_7] : memref<32x16xf32, #tpu.memory_space<vmem>>, vector<32x16xf32>
    %c0_8 = arith.constant 0 : index
    %c0_9 = arith.constant 0 : index
    %7 = vector.load %arg8[%c0_8, %c0_9] : memref<2x32xf32, #tpu.memory_space<vmem>>, vector<2x32xf32>
    %c0_i32_10 = arith.constant 0 : i32
    %8 = arith.index_cast %c0_i32_10 : i32 to index
    %c0_11 = arith.constant 0 : index
    %c0_12 = arith.constant 0 : index
    %9 = vector.load %arg1[%8, %c0_11, %c0_12] : memref<8x2x16xf32, #tpu.memory_space<vmem>>, vector<1x2x16xf32>
    %10 = vector.shape_cast %9 : vector<1x2x16xf32> to vector<2x16xf32>
    %cst = arith.constant dense<0.000000e+00> : vector<2x32xf32>
    %11 = tpu.matmul %10, %3, %cst {dimension_numbers = #tpu.dot_dimension_numbers<[1], [0], [0], [1], [0, 0, 1, 1], [], []>} : vector<2x16xf32>, vector<16x32xf32>, vector<2x32xf32> -> vector<2x32xf32>
    %12 = vector.broadcast %4 : vector<1x32xf32> to vector<2x32xf32>
    %13 = arith.addf %11, %12 : vector<2x32xf32>
    %cst_13 = arith.constant dense<0.000000e+00> : vector<2x32xf32>
    %14 = tpu.matmul %7, %5, %cst_13 {dimension_numbers = #tpu.dot_dimension_numbers<[1], [0], [0], [1], [0, 0, 1, 1], [], []>} : vector<2x32xf32>, vector<32x32xf32>, vector<2x32xf32> -> vector<2x32xf32>
    %15 = arith.addf %14, %13 : vector<2x32xf32>
    %16 = math.tanh %15 : vector<2x32xf32>
    %cst_14 = arith.constant dense<0.000000e+00> : vector<2x16xf32>
    %17 = tpu.matmul %16, %6, %cst_14 {dimension_numbers = #tpu.dot_dimension_numbers<[1], [0], [0], [1], [0, 0, 1, 1], [], []>} : vector<2x32xf32>, vector<32x16xf32>, vector<2x16xf32> -> vector<2x16xf32>
    %18 = arith.index_cast %c0_i32_10 : i32 to index
    %c0_15 = arith.constant 0 : index
    %c0_16 = arith.constant 0 : index
    %19 = vector.load %arg6[%18, %c0_15, %c0_16] : memref<8x2x16xf32, #tpu.memory_space<vmem>>, vector<1x2x16xf32>
    %20 = vector.shape_cast %19 : vector<1x2x16xf32> to vector<2x16xf32>
    %21 = vector.shape_cast %17 : vector<2x16xf32> to vector<1x2x16xf32>
    tpu.vector_store %arg6[%18, %c0_15, %c0_16], %21 {strides = array<i32>} : memref<8x2x16xf32, #tpu.memory_space<vmem>>, vector<1x2x16xf32>,
    %c1_i32 = arith.constant 1 : i32
    %22 = arith.index_cast %c1_i32 : i32 to index
    %c0_17 = arith.constant 0 : index
    %c0_18 = arith.constant 0 : index
    %23 = vector.load %arg1[%22, %c0_17, %c0_18] : memref<8x2x16xf32, #tpu.memory_space<vmem>>, vector<1x2x16xf32>
    %24 = vector.shape_cast %23 : vector<1x2x16xf32> to vector<2x16xf32>
    %cst_19 = arith.constant dense<0.000000e+00> : vector<2x32xf32>
    %25 = tpu.matmul %24, %3, %cst_19 {dimension_numbers = #tpu.dot_dimension_numbers<[1], [0], [0], [1], [0, 0, 1, 1], [], []>} : vector<2x16xf32>, vector<16x32xf32>, vector<2x32xf32> -> vector<2x32xf32>
    %26 = vector.broadcast %4 : vector<1x32xf32> to vector<2x32xf32>
    %27 = arith.addf %25, %26 : vector<2x32xf32>
    %cst_20 = arith.constant dense<0.000000e+00> : vector<2x32xf32>
    %28 = tpu.matmul %16, %5, %cst_20 {dimension_numbers = #tpu.dot_dimension_numbers<[1], [0], [0], [1], [0, 0, 1, 1], [], []>} : vector<2x32xf32>, vector<32x32xf32>, vector<2x32xf32> -> vector<2x32xf32>
    %29 = arith.addf %28, %27 : vector<2x32xf32>
    %30 = math.tanh %29 : vector<2x32xf32>
    %cst_21 = arith.constant dense<0.000000e+00> : vector<2x16xf32>
    %31 = tpu.matmul %30, %6, %cst_21 {dimension_numbers = #tpu.dot_dimension_numbers<[1], [0], [0], [1], [0, 0, 1, 1], [], []>} : vector<2x32xf32>, vector<32x16xf32>, vector<2x16xf32> -> vector<2x16xf32>
    %32 = arith.index_cast %c1_i32 : i32 to index
    %c0_22 = arith.constant 0 : index
    %c0_23 = arith.constant 0 : index
    %33 = vector.load %arg6[%32, %c0_22, %c0_23] : memref<8x2x16xf32, #tpu.memory_space<vmem>>, vector<1x2x16xf32>
    %34 = vector.shape_cast %33 : vector<1x2x16xf32> to vector<2x16xf32>
    %35 = vector.shape_cast %31 : vector<2x16xf32> to vector<1x2x16xf32>
    tpu.vector_store %arg6[%32, %c0_22, %c0_23], %35 {strides = array<i32>} : memref<8x2x16xf32, #tpu.memory_space<vmem>>, vector<1x2x16xf32>,
    %c2_i32 = arith.constant 2 : i32
    %36 = arith.index_cast %c2_i32 : i32 to index
    %c0_24 = arith.constant 0 : index
    %c0_25 = arith.constant 0 : index
    %37 = vector.load %arg1[%36, %c0_24, %c0_25] : memref<8x2x16xf32, #tpu.memory_space<vmem>>, vector<1x2x16xf32>
    %38 = vector.shape_cast %37 : vector<1x2x16xf32> to vector<2x16xf32>
    %cst_26 = arith.constant dense<0.000000e+00> : vector<2x32xf32>
    %39 = tpu.matmul %38, %3, %cst_26 {dimension_numbers = #tpu.dot_dimension_numbers<[1], [0], [0], [1], [0, 0, 1, 1], [], []>} : vector<2x16xf32>, vector<16x32xf32>, vector<2x32xf32> -> vector<2x32xf32>
    %40 = vector.broadcast %4 : vector<1x32xf32> to vector<2x32xf32>
    %41 = arith.addf %39, %40 : vector<2x32xf32>
    %cst_27 = arith.constant dense<0.000000e+00> : vector<2x32xf32>
    %42 = tpu.matmul %30, %5, %cst_27 {dimension_numbers = #tpu.dot_dimension_numbers<[1], [0], [0], [1], [0, 0, 1, 1], [], []>} : vector<2x32xf32>, vector<32x32xf32>, vector<2x32xf32> -> vector<2x32xf32>
    %43 = arith.addf %42, %41 : vector<2x32xf32>
    %44 = math.tanh %43 : vector<2x32xf32>
    %cst_28 = arith.constant dense<0.000000e+00> : vector<2x16xf32>
    %45 = tpu.matmul %44, %6, %cst_28 {dimension_numbers = #tpu.dot_dimension_numbers<[1], [0], [0], [1], [0, 0, 1, 1], [], []>} : vector<2x32xf32>, vector<32x16xf32>, vector<2x16xf32> -> vector<2x16xf32>
    %46 = arith.index_cast %c2_i32 : i32 to index
    %c0_29 = arith.constant 0 : index
    %c0_30 = arith.constant 0 : index
    %47 = vector.load %arg6[%46, %c0_29, %c0_30] : memref<8x2x16xf32, #tpu.memory_space<vmem>>, vector<1x2x16xf32>
    %48 = vector.shape_cast %47 : vector<1x2x16xf32> to vector<2x16xf32>
    %49 = vector.shape_cast %45 : vector<2x16xf32> to vector<1x2x16xf32>
    tpu.vector_store %arg6[%46, %c0_29, %c0_30], %49 {strides = array<i32>} : memref<8x2x16xf32, #tpu.memory_space<vmem>>, vector<1x2x16xf32>,
    %c3_i32 = arith.constant 3 : i32
    %50 = arith.index_cast %c3_i32 : i32 to index
    %c0_31 = arith.constant 0 : index
    %c0_32 = arith.constant 0 : index
    %51 = vector.load %arg1[%50, %c0_31, %c0_32] : memref<8x2x16xf32, #tpu.memory_space<vmem>>, vector<1x2x16xf32>
    %52 = vector.shape_cast %51 : vector<1x2x16xf32> to vector<2x16xf32>
    %cst_33 = arith.constant dense<0.000000e+00> : vector<2x32xf32>
    %53 = tpu.matmul %52, %3, %cst_33 {dimension_numbers = #tpu.dot_dimension_numbers<[1], [0], [0], [1], [0, 0, 1, 1], [], []>} : vector<2x16xf32>, vector<16x32xf32>, vector<2x32xf32> -> vector<2x32xf32>
    %54 = vector.broadcast %4 : vector<1x32xf32> to vector<2x32xf32>
    %55 = arith.addf %53, %54 : vector<2x32xf32>
    %cst_34 = arith.constant dense<0.000000e+00> : vector<2x32xf32>
    %56 = tpu.matmul %44, %5, %cst_34 {dimension_numbers = #tpu.dot_dimension_numbers<[1], [0], [0], [1], [0, 0, 1, 1], [], []>} : vector<2x32xf32>, vector<32x32xf32>, vector<2x32xf32> -> vector<2x32xf32>
    %57 = arith.addf %56, %55 : vector<2x32xf32>
    %58 = math.tanh %57 : vector<2x32xf32>
    %cst_35 = arith.constant dense<0.000000e+00> : vector<2x16xf32>
    %59 = tpu.matmul %58, %6, %cst_35 {dimension_numbers = #tpu.dot_dimension_numbers<[1], [0], [0], [1], [0, 0, 1, 1], [], []>} : vector<2x32xf32>, vector<32x16xf32>, vector<2x16xf32> -> vector<2x16xf32>
    %60 = arith.index_cast %c3_i32 : i32 to index
    %c0_36 = arith.constant 0 : index
    %c0_37 = arith.constant 0 : index
    %61 = vector.load %arg6[%60, %c0_36, %c0_37] : memref<8x2x16xf32, #tpu.memory_space<vmem>>, vector<1x2x16xf32>
    %62 = vector.shape_cast %61 : vector<1x2x16xf32> to vector<2x16xf32>
    %63 = vector.shape_cast %59 : vector<2x16xf32> to vector<1x2x16xf32>
    tpu.vector_store %arg6[%60, %c0_36, %c0_37], %63 {strides = array<i32>} : memref<8x2x16xf32, #tpu.memory_space<vmem>>, vector<1x2x16xf32>,
    %c4_i32 = arith.constant 4 : i32
    %64 = arith.index_cast %c4_i32 : i32 to index
    %c0_38 = arith.constant 0 : index
    %c0_39 = arith.constant 0 : index
    %65 = vector.load %arg1[%64, %c0_38, %c0_39] : memref<8x2x16xf32, #tpu.memory_space<vmem>>, vector<1x2x16xf32>
    %66 = vector.shape_cast %65 : vector<1x2x16xf32> to vector<2x16xf32>
    %cst_40 = arith.constant dense<0.000000e+00> : vector<2x32xf32>
    %67 = tpu.matmul %66, %3, %cst_40 {dimension_numbers = #tpu.dot_dimension_numbers<[1], [0], [0], [1], [0, 0, 1, 1], [], []>} : vector<2x16xf32>, vector<16x32xf32>, vector<2x32xf32> -> vector<2x32xf32>
    %68 = vector.broadcast %4 : vector<1x32xf32> to vector<2x32xf32>
    %69 = arith.addf %67, %68 : vector<2x32xf32>
    %cst_41 = arith.constant dense<0.000000e+00> : vector<2x32xf32>
    %70 = tpu.matmul %58, %5, %cst_41 {dimension_numbers = #tpu.dot_dimension_numbers<[1], [0], [0], [1], [0, 0, 1, 1], [], []>} : vector<2x32xf32>, vector<32x32xf32>, vector<2x32xf32> -> vector<2x32xf32>
    %71 = arith.addf %70, %69 : vector<2x32xf32>
    %72 = math.tanh %71 : vector<2x32xf32>
    %cst_42 = arith.constant dense<0.000000e+00> : vector<2x16xf32>
    %73 = tpu.matmul %72, %6, %cst_42 {dimension_numbers = #tpu.dot_dimension_numbers<[1], [0], [0], [1], [0, 0, 1, 1], [], []>} : vector<2x32xf32>, vector<32x16xf32>, vector<2x16xf32> -> vector<2x16xf32>
    %74 = arith.index_cast %c4_i32 : i32 to index
    %c0_43 = arith.constant 0 : index
    %c0_44 = arith.constant 0 : index
    %75 = vector.load %arg6[%74, %c0_43, %c0_44] : memref<8x2x16xf32, #tpu.memory_space<vmem>>, vector<1x2x16xf32>
    %76 = vector.shape_cast %75 : vector<1x2x16xf32> to vector<2x16xf32>
    %77 = vector.shape_cast %73 : vector<2x16xf32> to vector<1x2x16xf32>
    tpu.vector_store %arg6[%74, %c0_43, %c0_44], %77 {strides = array<i32>} : memref<8x2x16xf32, #tpu.memory_space<vmem>>, vector<1x2x16xf32>,
    %c5_i32 = arith.constant 5 : i32
    %78 = arith.index_cast %c5_i32 : i32 to index
    %c0_45 = arith.constant 0 : index
    %c0_46 = arith.constant 0 : index
    %79 = vector.load %arg1[%78, %c0_45, %c0_46] : memref<8x2x16xf32, #tpu.memory_space<vmem>>, vector<1x2x16xf32>
    %80 = vector.shape_cast %79 : vector<1x2x16xf32> to vector<2x16xf32>
    %cst_47 = arith.constant dense<0.000000e+00> : vector<2x32xf32>
    %81 = tpu.matmul %80, %3, %cst_47 {dimension_numbers = #tpu.dot_dimension_numbers<[1], [0], [0], [1], [0, 0, 1, 1], [], []>} : vector<2x16xf32>, vector<16x32xf32>, vector<2x32xf32> -> vector<2x32xf32>
    %82 = vector.broadcast %4 : vector<1x32xf32> to vector<2x32xf32>
    %83 = arith.addf %81, %82 : vector<2x32xf32>
    %cst_48 = arith.constant dense<0.000000e+00> : vector<2x32xf32>
    %84 = tpu.matmul %72, %5, %cst_48 {dimension_numbers = #tpu.dot_dimension_numbers<[1], [0], [0], [1], [0, 0, 1, 1], [], []>} : vector<2x32xf32>, vector<32x32xf32>, vector<2x32xf32> -> vector<2x32xf32>
    %85 = arith.addf %84, %83 : vector<2x32xf32>
    %86 = math.tanh %85 : vector<2x32xf32>
    %cst_49 = arith.constant dense<0.000000e+00> : vector<2x16xf32>
    %87 = tpu.matmul %86, %6, %cst_49 {dimension_numbers = #tpu.dot_dimension_numbers<[1], [0], [0], [1], [0, 0, 1, 1], [], []>} : vector<2x32xf32>, vector<32x16xf32>, vector<2x16xf32> -> vector<2x16xf32>
    %88 = arith.index_cast %c5_i32 : i32 to index
    %c0_50 = arith.constant 0 : index
    %c0_51 = arith.constant 0 : index
    %89 = vector.load %arg6[%88, %c0_50, %c0_51] : memref<8x2x16xf32, #tpu.memory_space<vmem>>, vector<1x2x16xf32>
    %90 = vector.shape_cast %89 : vector<1x2x16xf32> to vector<2x16xf32>
    %91 = vector.shape_cast %87 : vector<2x16xf32> to vector<1x2x16xf32>
    tpu.vector_store %arg6[%88, %c0_50, %c0_51], %91 {strides = array<i32>} : memref<8x2x16xf32, #tpu.memory_space<vmem>>, vector<1x2x16xf32>,
    %c6_i32 = arith.constant 6 : i32
    %92 = arith.index_cast %c6_i32 : i32 to index
    %c0_52 = arith.constant 0 : index
    %c0_53 = arith.constant 0 : index
    %93 = vector.load %arg1[%92, %c0_52, %c0_53] : memref<8x2x16xf32, #tpu.memory_space<vmem>>, vector<1x2x16xf32>
    %94 = vector.shape_cast %93 : vector<1x2x16xf32> to vector<2x16xf32>
    %cst_54 = arith.constant dense<0.000000e+00> : vector<2x32xf32>
    %95 = tpu.matmul %94, %3, %cst_54 {dimension_numbers = #tpu.dot_dimension_numbers<[1], [0], [0], [1], [0, 0, 1, 1], [], []>} : vector<2x16xf32>, vector<16x32xf32>, vector<2x32xf32> -> vector<2x32xf32>
    %96 = vector.broadcast %4 : vector<1x32xf32> to vector<2x32xf32>
    %97 = arith.addf %95, %96 : vector<2x32xf32>
    %cst_55 = arith.constant dense<0.000000e+00> : vector<2x32xf32>
    %98 = tpu.matmul %86, %5, %cst_55 {dimension_numbers = #tpu.dot_dimension_numbers<[1], [0], [0], [1], [0, 0, 1, 1], [], []>} : vector<2x32xf32>, vector<32x32xf32>, vector<2x32xf32> -> vector<2x32xf32>
    %99 = arith.addf %98, %97 : vector<2x32xf32>
    %100 = math.tanh %99 : vector<2x32xf32>
    %cst_56 = arith.constant dense<0.000000e+00> : vector<2x16xf32>
    %101 = tpu.matmul %100, %6, %cst_56 {dimension_numbers = #tpu.dot_dimension_numbers<[1], [0], [0], [1], [0, 0, 1, 1], [], []>} : vector<2x32xf32>, vector<32x16xf32>, vector<2x16xf32> -> vector<2x16xf32>
    %102 = arith.index_cast %c6_i32 : i32 to index
    %c0_57 = arith.constant 0 : index
    %c0_58 = arith.constant 0 : index
    %103 = vector.load %arg6[%102, %c0_57, %c0_58] : memref<8x2x16xf32, #tpu.memory_space<vmem>>, vector<1x2x16xf32>
    %104 = vector.shape_cast %103 : vector<1x2x16xf32> to vector<2x16xf32>
    %105 = vector.shape_cast %101 : vector<2x16xf32> to vector<1x2x16xf32>
    tpu.vector_store %arg6[%102, %c0_57, %c0_58], %105 {strides = array<i32>} : memref<8x2x16xf32, #tpu.memory_space<vmem>>, vector<1x2x16xf32>,
    %c7_i32 = arith.constant 7 : i32
    %106 = arith.index_cast %c7_i32 : i32 to index
    %c0_59 = arith.constant 0 : index
    %c0_60 = arith.constant 0 : index
    %107 = vector.load %arg1[%106, %c0_59, %c0_60] : memref<8x2x16xf32, #tpu.memory_space<vmem>>, vector<1x2x16xf32>
    %108 = vector.shape_cast %107 : vector<1x2x16xf32> to vector<2x16xf32>
    %cst_61 = arith.constant dense<0.000000e+00> : vector<2x32xf32>
    %109 = tpu.matmul %108, %3, %cst_61 {dimension_numbers = #tpu.dot_dimension_numbers<[1], [0], [0], [1], [0, 0, 1, 1], [], []>} : vector<2x16xf32>, vector<16x32xf32>, vector<2x32xf32> -> vector<2x32xf32>
    %110 = vector.broadcast %4 : vector<1x32xf32> to vector<2x32xf32>
    %111 = arith.addf %109, %110 : vector<2x32xf32>
    %cst_62 = arith.constant dense<0.000000e+00> : vector<2x32xf32>
    %112 = tpu.matmul %100, %5, %cst_62 {dimension_numbers = #tpu.dot_dimension_numbers<[1], [0], [0], [1], [0, 0, 1, 1], [], []>} : vector<2x32xf32>, vector<32x32xf32>, vector<2x32xf32> -> vector<2x32xf32>
    %113 = arith.addf %112, %111 : vector<2x32xf32>
    %114 = math.tanh %113 : vector<2x32xf32>
    %cst_63 = arith.constant dense<0.000000e+00> : vector<2x16xf32>
    %115 = tpu.matmul %114, %6, %cst_63 {dimension_numbers = #tpu.dot_dimension_numbers<[1], [0], [0], [1], [0, 0, 1, 1], [], []>} : vector<2x32xf32>, vector<32x16xf32>, vector<2x16xf32> -> vector<2x16xf32>
    %116 = arith.index_cast %c7_i32 : i32 to index
    %c0_64 = arith.constant 0 : index
    %c0_65 = arith.constant 0 : index
    %117 = vector.load %arg6[%116, %c0_64, %c0_65] : memref<8x2x16xf32, #tpu.memory_space<vmem>>, vector<1x2x16xf32>
    %118 = vector.shape_cast %117 : vector<1x2x16xf32> to vector<2x16xf32>
    %119 = vector.shape_cast %115 : vector<2x16xf32> to vector<1x2x16xf32>
    tpu.vector_store %arg6[%116, %c0_64, %c0_65], %119 {strides = array<i32>} : memref<8x2x16xf32, #tpu.memory_space<vmem>>, vector<1x2x16xf32>,
    %c8_i32 = arith.constant 8 : i32
    %c0_66 = arith.constant 0 : index
    %c0_67 = arith.constant 0 : index
    %120 = vector.load %arg8[%c0_66, %c0_67] : memref<2x32xf32, #tpu.memory_space<vmem>>, vector<2x32xf32>
    tpu.vector_store %arg8[%c0_66, %c0_67], %114 {strides = array<i32>} : memref<2x32xf32, #tpu.memory_space<vmem>>, vector<2x32xf32>,
    %c0_68 = arith.constant 0 : index
    %c0_69 = arith.constant 0 : index
    %121 = vector.load %arg7[%c0_68, %c0_69] : memref<2x32xf32, #tpu.memory_space<vmem>>, vector<2x32xf32>
    tpu.vector_store %arg7[%c0_68, %c0_69], %114 {strides = array<i32>} : memref<2x32xf32, #tpu.memory_space<vmem>>, vector<2x32xf32>,
    return
  }
  func.func @transform_0(%arg0: i32) -> (i32, i32, i32) {
    %c0_i32 = arith.constant 0 : i32
    %c0_i32_0 = arith.constant 0 : i32
    %c0_i32_1 = arith.constant 0 : i32
    return %arg0, %c0_i32, %c0_i32_0 : i32, i32, i32
  }
  func.func @transform_1(%arg0: i32) -> (i32, i32) {
    %c0_i32 = arith.constant 0 : i32
    %c0_i32_0 = arith.constant 0 : i32
    %c0_i32_1 = arith.constant 0 : i32
    return %c0_i32, %c0_i32_0 : i32, i32
  }
  func.func @transform_2(%arg0: i32) -> (i32, i32) {
    %c0_i32 = arith.constant 0 : i32
    %c0_i32_0 = arith.constant 0 : i32
    %c0_i32_1 = arith.constant 0 : i32
    return %c0_i32, %c0_i32_0 : i32, i32
  }
  func.func @transform_3(%arg0: i32) -> (i32, i32) {
    %c0_i32 = arith.constant 0 : i32
    %c0_i32_0 = arith.constant 0 : i32
    %c0_i32_1 = arith.constant 0 : i32
    return %c0_i32, %c0_i32_0 : i32, i32
  }
  func.func @transform_4(%arg0: i32) -> (i32, i32) {
    %c0_i32 = arith.constant 0 : i32
    %c0_i32_0 = arith.constant 0 : i32
    %c0_i32_1 = arith.constant 0 : i32
    return %c0_i32, %c0_i32_0 : i32, i32
  }
  func.func @transform_5(%arg0: i32) -> (i32, i32, i32) {
    %c0_i32 = arith.constant 0 : i32
    %c0_i32_0 = arith.constant 0 : i32
    %c0_i32_1 = arith.constant 0 : i32
    return %arg0, %c0_i32, %c0_i32_0 : i32, i32, i32
  }
  func.func @transform_6(%arg0: i32) -> (i32, i32) {
    %c0_i32 = arith.constant 0 : i32
    %c0_i32_0 = arith.constant 0 : i32
    %c0_i32_1 = arith.constant 0 : i32
    return %c0_i32, %c0_i32_0 : i32, i32
  }
}

</mosaic_0001>

<llo_original>
// kernel: rnn_forward.1
$region0: #{rnn_forward.1}
  #allocation0 [shape = 'u32[]', space=smem, size = 0x4, offset = 0x4, fixed_abs, tag = 'smem constant byte address 0x4 - core index']
  #allocation1 [shape = 'u32[72,128]{1,0:T(1,128)}', space=vmem, size = 0x9000, scoped, tag = 'internal scratch']
  #allocation2 [shape = 'f32[2,32]{1,0:T(2,128)}', space=vmem, size = 0x400, scoped, tag = 'scratch operand']
  %s0 = inlined_call_operand.vmem [shape: f32[8,2,16], index: 0, kind: input, shape index: {}]
  %s1 = inlined_call_operand.vmem [shape: f32[16,32], index: 1, kind: input, shape index: {}]
  %s2 = inlined_call_operand.vmem [shape: f32[1,32], index: 2, kind: input, shape index: {}]
  %s3 = inlined_call_operand.vmem [shape: f32[32,32], index: 3, kind: input, shape index: {}]
  %s4 = inlined_call_operand.vmem [shape: f32[32,16], index: 4, kind: input, shape index: {}]
  %s5 = inlined_call_operand.vmem [shape: f32[8,2,16], index: 5, kind: output, shape index: {0}]
  %s6 = inlined_call_operand.hbm [shape: f32[2,32], index: 6, kind: output, shape index: {1}]
  %7 = xla_tuple %s5, %s6
  %s8 = sld [smem:[#allocation0]]
  $region42: #{rnn_forward.1} parent=0
    _
  %s10 = ssub.s32 1, %s8
  %s11 = scalar_select 0, %s10, %s8
  $region1: #{rnn_forward.1} parent=0
    #allocation3 [shape = 'u8[1024]{0}', space=vmem, size = 0x400, scoped, tag = 'output window, operand 1, single buffered']
    #allocation4 [shape = 's32[1]{0}', space=sflag, size = 0x4, scoped, tag = 'scoped memory for rnn_forward.1']
    %12 = vsyncpa [#allocation4], 0
    // Predicated region
    $region2: #{rnn_forward.1} parent=1 // pred_check
      _
    $region3: #{rnn_forward.1} parent=1 // pred_check_branch
      %14 = sbr.rel (0) target = $region5
    $region4: #{rnn_forward.1} parent=1 // pred_region
      _
    $region5: #{rnn_forward.1} parent=1 // pred_fallthru
      _
    // Predicated region
    $region6: #{rnn_forward.1} parent=1 // pred_check
      _
    $region7: #{rnn_forward.1} parent=1 // pred_check_branch
      %16 = sbr.rel (0) target = $region9
    $region8: #{rnn_forward.1} parent=1 // pred_region
      _
    $region9: #{rnn_forward.1} parent=1 // pred_fallthru
      _
    // Predicated region
    $region10: #{rnn_forward.1} parent=1 // pred_check
      _
    $region11: #{rnn_forward.1} parent=1 // pred_check_branch
      %18 = sbr.rel (0) target = $region13
    $region12: #{rnn_forward.1} parent=1 // pred_region
      _
    $region13: #{rnn_forward.1} parent=1 // pred_fallthru
      _
    // Predicated region
    $region14: #{rnn_forward.1} parent=1 // pred_check
      _
    $region15: #{rnn_forward.1} parent=1 // pred_check_branch
      %20 = sbr.rel (0) target = $region17
    $region16: #{rnn_forward.1} parent=1 // pred_region
      _
    $region17: #{rnn_forward.1} parent=1 // pred_fallthru
      _
    // Predicated region
    $region18: #{rnn_forward.1} parent=1 // pred_check
      _
    $region19: #{rnn_forward.1} parent=1 // pred_check_branch
      %22 = sbr.rel (0) target = $region21
    $region20: #{rnn_forward.1} parent=1 // pred_region
      _
    $region21: #{rnn_forward.1} parent=1 // pred_fallthru
      _
    %p23 = scmp.eq.s32.totalorder 0, 0
    // Predicated region
    $region22: #{rnn_forward.1} parent=1 // pred_check
      %p24 = pneg %p23
    $region23: #{rnn_forward.1} parent=1 // pred_check_branch
      %26 = sbr.rel (%p24) target = $region25
    $region24: #{rnn_forward.1} parent=1 // pred_region
      %vm27 = vcmask 254976
      %28 = vst.msk [vmem:[#allocation2] sm:$0x3] %vm27, 0.0
    $region25: #{rnn_forward.1} parent=1 // pred_fallthru
      _
    %v29 = vld [vmem:[%s1] sm:$0xff]
    %v30 = vld [vmem:[%s1 + $0x8] sm:$0xff]
    %v31 = vld [vmem:[%s2] sm:$0x1]
    %v32 = vld [vmem:[%s3] sm:$0xff]
    %v33 = vld [vmem:[%s3 + $0x8] sm:$0xff]
    %v34 = vld [vmem:[%s3 + $0x10] sm:$0xff]
    %v35 = vld [vmem:[%s3 + $0x18] sm:$0xff]
    %v36 = vld [vmem:[%s4] sm:$0xff]
    %v37 = vld [vmem:[%s4 + $0x8] sm:$0xff]
    %v38 = vld [vmem:[%s4 + $0x10] sm:$0xff]
    %v39 = vld [vmem:[%s4 + $0x18] sm:$0xff]
    %v40 = vld [vmem:[#allocation2] sm:$0x3]
    %v41 = vld [vmem:[%s0] sm:$0x3]
    %v43 = vperm.slane %v31, 0
    %vm45 = vcmask 130048
    %v47 = vsel %vm45, %v41, 0
    %49 = vmatpush.msra.mxu0 0.0
    %50 = vmatpush.msra.mxu0 0.0
    %51 = vmatpush.msra.mxu0 0.0
    %52 = vmatpush.msra.mxu0 0.0
    %53 = vmatpush.msra.mxu0 0.0
    %54 = vmatpush.msra.mxu0 0.0
    %55 = vmatpush.msra.mxu0 0.0
    %56 = vmatpush.msra.mxu0 0.0
    %57 = vmatpush.msra.mxu0 0.0
    %58 = vmatpush.msra.mxu0 0.0
    %59 = vmatpush.msra.mxu0 0.0
    %60 = vmatpush.msra.mxu0 0.0
    %61 = vmatpush.msra.mxu0 0.0
    %62 = vmatpush.msra.mxu0 0.0
    %63 = vmatpush.msra.mxu0 %v30
    %64 = vmatpush.msra.mxu0 %v29
    %65 = vmatmul.f32.gmra.mxu0 %v47
    %v66 = vpop.f32.mrf.mxu0
    %v67 = vadd.f32 %v43, %v66
    %68 = vdwg.mxu0
    %vm69 = vcmask 261120
    %v71 = vsel %vm69, %v40, 0
    %73 = vmatpush.msra.mxu0 0.0
    %74 = vmatpush.msra.mxu0 0.0
    %75 = vmatpush.msra.mxu0 0.0
    %76 = vmatpush.msra.mxu0 0.0
    %77 = vmatpush.msra.mxu0 0.0
    %78 = vmatpush.msra.mxu0 0.0
    %79 = vmatpush.msra.mxu0 0.0
    %80 = vmatpush.msra.mxu0 0.0
    %81 = vmatpush.msra.mxu0 0.0
    %82 = vmatpush.msra.mxu0 0.0
    %83 = vmatpush.msra.mxu0 0.0
    %84 = vmatpush.msra.mxu0 0.0
    %85 = vmatpush.msra.mxu0 %v35
    %86 = vmatpush.msra.mxu0 %v34
    %87 = vmatpush.msra.mxu0 %v33
    %88 = vmatpush.msra.mxu0 %v32
    %89 = vmatmul.f32.gmra.mxu0 %v71
    %v90 = vpop.f32.mrf.mxu0
    %v91 = vadd.f32 %v67, %v90
    %92 = vdwg.mxu0
    %v93 = vtanh.pop %v91
    %v95 = vsel %vm69, %v93, 0
    %97 = vmatpush.msra.mxu0 0.0
    %98 = vmatpush.msra.mxu0 0.0
    %99 = vmatpush.msra.mxu0 0.0
    %100 = vmatpush.msra.mxu0 0.0
    %101 = vmatpush.msra.mxu0 0.0
    %102 = vmatpush.msra.mxu0 0.0
    %103 = vmatpush.msra.mxu0 0.0
    %104 = vmatpush.msra.mxu0 0.0
    %105 = vmatpush.msra.mxu0 0.0
    %106 = vmatpush.msra.mxu0 0.0
    %107 = vmatpush.msra.mxu0 0.0
    %108 = vmatpush.msra.mxu0 0.0
    %109 = vmatpush.msra.mxu0 %v39
    %110 = vmatpush.msra.mxu0 %v38
    %111 = vmatpush.msra.mxu0 %v37
    %112 = vmatpush.msra.mxu0 %v36
    %113 = vmatmul.f32.gmra.mxu0 %v95
    %v114 = vpop.f32.mrf.mxu0
    %v115 = vadd.f32 0.0, %v114
    %116 = vdwg.mxu0
    %vm117 = vcmask 123904
    %118 = vst.msk [vmem:[%s5] sm:$0x3] %vm117, %v115
    %s119 = scalar_lea.vmem %s0, 2
    %v120 = vld [vmem:[%s119] sm:$0x3]
    %v122 = vsel %vm45, %v120, 0
    %124 = vmatpush.msra.mxu0 0.0
    %125 = vmatpush.msra.mxu0 0.0
    %126 = vmatpush.msra.mxu0 0.0
    %127 = vmatpush.msra.mxu0 0.0
    %128 = vmatpush.msra.mxu0 0.0
    %129 = vmatpush.msra.mxu0 0.0
    %130 = vmatpush.msra.mxu0 0.0
    %131 = vmatpush.msra.mxu0 0.0
    %132 = vmatpush.msra.mxu0 0.0
    %133 = vmatpush.msra.mxu0 0.0
    %134 = vmatpush.msra.mxu0 0.0
    %135 = vmatpush.msra.mxu0 0.0
    %136 = vmatpush.msra.mxu0 0.0
    %137 = vmatpush.msra.mxu0 0.0
    %138 = vmatpush.msra.mxu0 %v30
    %139 = vmatpush.msra.mxu0 %v29
    %140 = vmatmul.f32.gmra.mxu0 %v122
    %v141 = vpop.f32.mrf.mxu0
    %v142 = vadd.f32 %v43, %v141
    %143 = vdwg.mxu0
    %144 = vmatpush.msra.mxu0 0.0
    %145 = vmatpush.msra.mxu0 0.0
    %146 = vmatpush.msra.mxu0 0.0
    %147 = vmatpush.msra.mxu0 0.0
    %148 = vmatpush.msra.mxu0 0.0
    %149 = vmatpush.msra.mxu0 0.0
    %150 = vmatpush.msra.mxu0 0.0
    %151 = vmatpush.msra.mxu0 0.0
    %152 = vmatpush.msra.mxu0 0.0
    %153 = vmatpush.msra.mxu0 0.0
    %154 = vmatpush.msra.mxu0 0.0
    %155 = vmatpush.msra.mxu0 0.0
    %156 = vmatpush.msra.mxu0 %v35
    %157 = vmatpush.msra.mxu0 %v34
    %158 = vmatpush.msra.mxu0 %v33
    %159 = vmatpush.msra.mxu0 %v32
    %160 = vmatmul.f32.gmra.mxu0 %v95
    %v161 = vpop.f32.mrf.mxu0
    %v162 = vadd.f32 %v142, %v161
    %163 = vdwg.mxu0
    %v164 = vtanh.pop %v162
    %v166 = vsel %vm69, %v164, 0
    %168 = vmatpush.msra.mxu0 0.0
    %169 = vmatpush.msra.mxu0 0.0
    %170 = vmatpush.msra.mxu0 0.0
    %171 = vmatpush.msra.mxu0 0.0
    %172 = vmatpush.msra.mxu0 0.0
    %173 = vmatpush.msra.mxu0 0.0
    %174 = vmatpush.msra.mxu0 0.0
    %175 = vmatpush.msra.mxu0 0.0
    %176 = vmatpush.msra.mxu0 0.0
    %177 = vmatpush.msra.mxu0 0.0
    %178 = vmatpush.msra.mxu0 0.0
    %179 = vmatpush.msra.mxu0 0.0
    %180 = vmatpush.msra.mxu0 %v39
    %181 = vmatpush.msra.mxu0 %v38
    %182 = vmatpush.msra.mxu0 %v37
    %183 = vmatpush.msra.mxu0 %v36
    %184 = vmatmul.f32.gmra.mxu0 %v166
    %v185 = vpop.f32.mrf.mxu0
    %v186 = vadd.f32 0.0, %v185
    %187 = vdwg.mxu0
    %s188 = scalar_lea.vmem %s5, 2
    %189 = vst.msk [vmem:[%s188] sm:$0x3] %vm117, %v186
    %s190 = scalar_lea.vmem %s0, 4
    %v191 = vld [vmem:[%s190] sm:$0x3]
    %v193 = vsel %vm45, %v191, 0
    %195 = vmatpush.msra.mxu0 0.0
    %196 = vmatpush.msra.mxu0 0.0
    %197 = vmatpush.msra.mxu0 0.0
    %198 = vmatpush.msra.mxu0 0.0
    %199 = vmatpush.msra.mxu0 0.0
    %200 = vmatpush.msra.mxu0 0.0
    %201 = vmatpush.msra.mxu0 0.0
    %202 = vmatpush.msra.mxu0 0.0
    %203 = vmatpush.msra.mxu0 0.0
    %204 = vmatpush.msra.mxu0 0.0
    %205 = vmatpush.msra.mxu0 0.0
    %206 = vmatpush.msra.mxu0 0.0
    %207 = vmatpush.msra.mxu0 0.0
    %208 = vmatpush.msra.mxu0 0.0
    %209 = vmatpush.msra.mxu0 %v30
    %210 = vmatpush.msra.mxu0 %v29
    %211 = vmatmul.f32.gmra.mxu0 %v193
    %v212 = vpop.f32.mrf.mxu0
    %v213 = vadd.f32 %v43, %v212
    %214 = vdwg.mxu0
    %215 = vmatpush.msra.mxu0 0.0
    %216 = vmatpush.msra.mxu0 0.0
    %217 = vmatpush.msra.mxu0 0.0
    %218 = vmatpush.msra.mxu0 0.0
    %219 = vmatpush.msra.mxu0 0.0
    %220 = vmatpush.msra.mxu0 0.0
    %221 = vmatpush.msra.mxu0 0.0
    %222 = vmatpush.msra.mxu0 0.0
    %223 = vmatpush.msra.mxu0 0.0
    %224 = vmatpush.msra.mxu0 0.0
    %225 = vmatpush.msra.mxu0 0.0
    %226 = vmatpush.msra.mxu0 0.0
    %227 = vmatpush.msra.mxu0 %v35
    %228 = vmatpush.msra.mxu0 %v34
    %229 = vmatpush.msra.mxu0 %v33
    %230 = vmatpush.msra.mxu0 %v32
    %231 = vmatmul.f32.gmra.mxu0 %v166
    %v232 = vpop.f32.mrf.mxu0
    %v233 = vadd.f32 %v213, %v232
    %234 = vdwg.mxu0
    %v235 = vtanh.pop %v233
    %v237 = vsel %vm69, %v235, 0
    %239 = vmatpush.msra.mxu0 0.0
    %240 = vmatpush.msra.mxu0 0.0
    %241 = vmatpush.msra.mxu0 0.0
    %242 = vmatpush.msra.mxu0 0.0
    %243 = vmatpush.msra.mxu0 0.0
    %244 = vmatpush.msra.mxu0 0.0
    %245 = vmatpush.msra.mxu0 0.0
    %246 = vmatpush.msra.mxu0 0.0
    %247 = vmatpush.msra.mxu0 0.0
    %248 = vmatpush.msra.mxu0 0.0
    %249 = vmatpush.msra.mxu0 0.0
    %250 = vmatpush.msra.mxu0 0.0
    %251 = vmatpush.msra.mxu0 %v39
    %252 = vmatpush.msra.mxu0 %v38
    %253 = vmatpush.msra.mxu0 %v37
    %254 = vmatpush.msra.mxu0 %v36
    %255 = vmatmul.f32.gmra.mxu0 %v237
    %v256 = vpop.f32.mrf.mxu0
    %v257 = vadd.f32 0.0, %v256
    %258 = vdwg.mxu0
    %s259 = scalar_lea.vmem %s5, 4
    %260 = vst.msk [vmem:[%s259] sm:$0x3] %vm117, %v257
    %s261 = scalar_lea.vmem %s0, 6
    %v262 = vld [vmem:[%s261] sm:$0x3]
    %v264 = vsel %vm45, %v262, 0
    %266 = vmatpush.msra.mxu0 0.0
    %267 = vmatpush.msra.mxu0 0.0
    %268 = vmatpush.msra.mxu0 0.0
    %269 = vmatpush.msra.mxu0 0.0
    %270 = vmatpush.msra.mxu0 0.0
    %271 = vmatpush.msra.mxu0 0.0
    %272 = vmatpush.msra.mxu0 0.0
    %273 = vmatpush.msra.mxu0 0.0
    %274 = vmatpush.msra.mxu0 0.0
    %275 = vmatpush.msra.mxu0 0.0
    %276 = vmatpush.msra.mxu0 0.0
    %277 = vmatpush.msra.mxu0 0.0
    %278 = vmatpush.msra.mxu0 0.0
    %279 = vmatpush.msra.mxu0 0.0
    %280 = vmatpush.msra.mxu0 %v30
    %281 = vmatpush.msra.mxu0 %v29
    %282 = vmatmul.f32.gmra.mxu0 %v264
    %v283 = vpop.f32.mrf.mxu0
    %v284 = vadd.f32 %v43, %v283
    %285 = vdwg.mxu0
    %286 = vmatpush.msra.mxu0 0.0
    %287 = vmatpush.msra.mxu0 0.0
    %288 = vmatpush.msra.mxu0 0.0
    %289 = vmatpush.msra.mxu0 0.0
    %290 = vmatpush.msra.mxu0 0.0
    %291 = vmatpush.msra.mxu0 0.0
    %292 = vmatpush.msra.mxu0 0.0
    %293 = vmatpush.msra.mxu0 0.0
    %294 = vmatpush.msra.mxu0 0.0
    %295 = vmatpush.msra.mxu0 0.0
    %296 = vmatpush.msra.mxu0 0.0
    %297 = vmatpush.msra.mxu0 0.0
    %298 = vmatpush.msra.mxu0 %v35
    %299 = vmatpush.msra.mxu0 %v34
    %300 = vmatpush.msra.mxu0 %v33
    %301 = vmatpush.msra.mxu0 %v32
    %302 = vmatmul.f32.gmra.mxu0 %v237
    %v303 = vpop.f32.mrf.mxu0
    %v304 = vadd.f32 %v284, %v303
    %305 = vdwg.mxu0
    %v306 = vtanh.pop %v304
    %v308 = vsel %vm69, %v306, 0
    %310 = vmatpush.msra.mxu0 0.0
    %311 = vmatpush.msra.mxu0 0.0
    %312 = vmatpush.msra.mxu0 0.0
    %313 = vmatpush.msra.mxu0 0.0
    %314 = vmatpush.msra.mxu0 0.0
    %315 = vmatpush.msra.mxu0 0.0
    %316 = vmatpush.msra.mxu0 0.0
    %317 = vmatpush.msra.mxu0 0.0
    %318 = vmatpush.msra.mxu0 0.0
    %319 = vmatpush.msra.mxu0 0.0
    %320 = vmatpush.msra.mxu0 0.0
    %321 = vmatpush.msra.mxu0 0.0
    %322 = vmatpush.msra.mxu0 %v39
    %323 = vmatpush.msra.mxu0 %v38
    %324 = vmatpush.msra.mxu0 %v37
    %325 = vmatpush.msra.mxu0 %v36
    %326 = vmatmul.f32.gmra.mxu0 %v308
    %v327 = vpop.f32.mrf.mxu0
    %v328 = vadd.f32 0.0, %v327
    %329 = vdwg.mxu0
    %s330 = scalar_lea.vmem %s5, 6
    %331 = vst.msk [vmem:[%s330] sm:$0x3] %vm117, %v328
    %s332 = scalar_lea.vmem %s0, 8
    %v333 = vld [vmem:[%s332] sm:$0x3]
    %v335 = vsel %vm45, %v333, 0
    %337 = vmatpush.msra.mxu0 0.0
    %338 = vmatpush.msra.mxu0 0.0
    %339 = vmatpush.msra.mxu0 0.0
    %340 = vmatpush.msra.mxu0 0.0
    %341 = vmatpush.msra.mxu0 0.0
    %342 = vmatpush.msra.mxu0 0.0
    %343 = vmatpush.msra.mxu0 0.0
    %344 = vmatpush.msra.mxu0 0.0
    %345 = vmatpush.msra.mxu0 0.0
    %346 = vmatpush.msra.mxu0 0.0
    %347 = vmatpush.msra.mxu0 0.0
    %348 = vmatpush.msra.mxu0 0.0
    %349 = vmatpush.msra.mxu0 0.0
    %350 = vmatpush.msra.mxu0 0.0
    %351 = vmatpush.msra.mxu0 %v30
    %352 = vmatpush.msra.mxu0 %v29
    %353 = vmatmul.f32.gmra.mxu0 %v335
    %v354 = vpop.f32.mrf.mxu0
    %v355 = vadd.f32 %v43, %v354
    %356 = vdwg.mxu0
    %357 = vmatpush.msra.mxu0 0.0
    %358 = vmatpush.msra.mxu0 0.0
    %359 = vmatpush.msra.mxu0 0.0
    %360 = vmatpush.msra.mxu0 0.0
    %361 = vmatpush.msra.mxu0 0.0
    %362 = vmatpush.msra.mxu0 0.0
    %363 = vmatpush.msra.mxu0 0.0
    %364 = vmatpush.msra.mxu0 0.0
    %365 = vmatpush.msra.mxu0 0.0
    %366 = vmatpush.msra.mxu0 0.0
    %367 = vmatpush.msra.mxu0 0.0
    %368 = vmatpush.msra.mxu0 0.0
    %369 = vmatpush.msra.mxu0 %v35
    %370 = vmatpush.msra.mxu0 %v34
    %371 = vmatpush.msra.mxu0 %v33
    %372 = vmatpush.msra.mxu0 %v32
    %373 = vmatmul.f32.gmra.mxu0 %v308
    %v374 = vpop.f32.mrf.mxu0
    %v375 = vadd.f32 %v355, %v374
    %376 = vdwg.mxu0
    %v377 = vtanh.pop %v375
    %v379 = vsel %vm69, %v377, 0
    %381 = vmatpush.msra.mxu0 0.0
    %382 = vmatpush.msra.mxu0 0.0
    %383 = vmatpush.msra.mxu0 0.0
    %384 = vmatpush.msra.mxu0 0.0
    %385 = vmatpush.msra.mxu0 0.0
    %386 = vmatpush.msra.mxu0 0.0
    %387 = vmatpush.msra.mxu0 0.0
    %388 = vmatpush.msra.mxu0 0.0
    %389 = vmatpush.msra.mxu0 0.0
    %390 = vmatpush.msra.mxu0 0.0
    %391 = vmatpush.msra.mxu0 0.0
    %392 = vmatpush.msra.mxu0 0.0
    %393 = vmatpush.msra.mxu0 %v39
    %394 = vmatpush.msra.mxu0 %v38
    %395 = vmatpush.msra.mxu0 %v37
    %396 = vmatpush.msra.mxu0 %v36
    %397 = vmatmul.f32.gmra.mxu0 %v379
    %v398 = vpop.f32.mrf.mxu0
    %v399 = vadd.f32 0.0, %v398
    %400 = vdwg.mxu0
    %s401 = scalar_lea.vmem %s5, 8
    %402 = vst.msk [vmem:[%s401] sm:$0x3] %vm117, %v399
    %s403 = scalar_lea.vmem %s0, 10
    %v404 = vld [vmem:[%s403] sm:$0x3]
    %v406 = vsel %vm45, %v404, 0
    %408 = vmatpush.msra.mxu0 0.0
    %409 = vmatpush.msra.mxu0 0.0
    %410 = vmatpush.msra.mxu0 0.0
    %411 = vmatpush.msra.mxu0 0.0
    %412 = vmatpush.msra.mxu0 0.0
    %413 = vmatpush.msra.mxu0 0.0
    %414 = vmatpush.msra.mxu0 0.0
    %415 = vmatpush.msra.mxu0 0.0
    %416 = vmatpush.msra.mxu0 0.0
    %417 = vmatpush.msra.mxu0 0.0
    %418 = vmatpush.msra.mxu0 0.0
    %419 = vmatpush.msra.mxu0 0.0
    %420 = vmatpush.msra.mxu0 0.0
    %421 = vmatpush.msra.mxu0 0.0
    %422 = vmatpush.msra.mxu0 %v30
    %423 = vmatpush.msra.mxu0 %v29
    %424 = vmatmul.f32.gmra.mxu0 %v406
    %v425 = vpop.f32.mrf.mxu0
    %v426 = vadd.f32 %v43, %v425
    %427 = vdwg.mxu0
    %428 = vmatpush.msra.mxu0 0.0
    %429 = vmatpush.msra.mxu0 0.0
    %430 = vmatpush.msra.mxu0 0.0
    %431 = vmatpush.msra.mxu0 0.0
    %432 = vmatpush.msra.mxu0 0.0
    %433 = vmatpush.msra.mxu0 0.0
    %434 = vmatpush.msra.mxu0 0.0
    %435 = vmatpush.msra.mxu0 0.0
    %436 = vmatpush.msra.mxu0 0.0
    %437 = vmatpush.msra.mxu0 0.0
    %438 = vmatpush.msra.mxu0 0.0
    %439 = vmatpush.msra.mxu0 0.0
    %440 = vmatpush.msra.mxu0 %v35
    %441 = vmatpush.msra.mxu0 %v34
    %442 = vmatpush.msra.mxu0 %v33
    %443 = vmatpush.msra.mxu0 %v32
    %444 = vmatmul.f32.gmra.mxu0 %v379
    %v445 = vpop.f32.mrf.mxu0
    %v446 = vadd.f32 %v426, %v445
    %447 = vdwg.mxu0
    %v448 = vtanh.pop %v446
    %v450 = vsel %vm69, %v448, 0
    %452 = vmatpush.msra.mxu0 0.0
    %453 = vmatpush.msra.mxu0 0.0
    %454 = vmatpush.msra.mxu0 0.0
    %455 = vmatpush.msra.mxu0 0.0
    %456 = vmatpush.msra.mxu0 0.0
    %457 = vmatpush.msra.mxu0 0.0
    %458 = vmatpush.msra.mxu0 0.0
    %459 = vmatpush.msra.mxu0 0.0
    %460 = vmatpush.msra.mxu0 0.0
    %461 = vmatpush.msra.mxu0 0.0
    %462 = vmatpush.msra.mxu0 0.0
    %463 = vmatpush.msra.mxu0 0.0
    %464 = vmatpush.msra.mxu0 %v39
    %465 = vmatpush.msra.mxu0 %v38
    %466 = vmatpush.msra.mxu0 %v37
    %467 = vmatpush.msra.mxu0 %v36
    %468 = vmatmul.f32.gmra.mxu0 %v450
    %v469 = vpop.f32.mrf.mxu0
    %v470 = vadd.f32 0.0, %v469
    %471 = vdwg.mxu0
    %s472 = scalar_lea.vmem %s5, 10
    %473 = vst.msk [vmem:[%s472] sm:$0x3] %vm117, %v470
    %s474 = scalar_lea.vmem %s0, 12
    %v475 = vld [vmem:[%s474] sm:$0x3]
    %v477 = vsel %vm45, %v475, 0
    %479 = vmatpush.msra.mxu0 0.0
    %480 = vmatpush.msra.mxu0 0.0
    %481 = vmatpush.msra.mxu0 0.0
    %482 = vmatpush.msra.mxu0 0.0
    %483 = vmatpush.msra.mxu0 0.0
    %484 = vmatpush.msra.mxu0 0.0
    %485 = vmatpush.msra.mxu0 0.0
    %486 = vmatpush.msra.mxu0 0.0
    %487 = vmatpush.msra.mxu0 0.0
    %488 = vmatpush.msra.mxu0 0.0
    %489 = vmatpush.msra.mxu0 0.0
    %490 = vmatpush.msra.mxu0 0.0
    %491 = vmatpush.msra.mxu0 0.0
    %492 = vmatpush.msra.mxu0 0.0
    %493 = vmatpush.msra.mxu0 %v30
    %494 = vmatpush.msra.mxu0 %v29
    %495 = vmatmul.f32.gmra.mxu0 %v477
    %v496 = vpop.f32.mrf.mxu0
    %v497 = vadd.f32 %v43, %v496
    %498 = vdwg.mxu0
    %499 = vmatpush.msra.mxu0 0.0
    %500 = vmatpush.msra.mxu0 0.0
    %501 = vmatpush.msra.mxu0 0.0
    %502 = vmatpush.msra.mxu0 0.0
    %503 = vmatpush.msra.mxu0 0.0
    %504 = vmatpush.msra.mxu0 0.0
    %505 = vmatpush.msra.mxu0 0.0
    %506 = vmatpush.msra.mxu0 0.0
    %507 = vmatpush.msra.mxu0 0.0
    %508 = vmatpush.msra.mxu0 0.0
    %509 = vmatpush.msra.mxu0 0.0
    %510 = vmatpush.msra.mxu0 0.0
    %511 = vmatpush.msra.mxu0 %v35
    %512 = vmatpush.msra.mxu0 %v34
    %513 = vmatpush.msra.mxu0 %v33
    %514 = vmatpush.msra.mxu0 %v32
    %515 = vmatmul.f32.gmra.mxu0 %v450
    %v516 = vpop.f32.mrf.mxu0
    %v517 = vadd.f32 %v497, %v516
    %518 = vdwg.mxu0
    %v519 = vtanh.pop %v517
    %v521 = vsel %vm69, %v519, 0
    %523 = vmatpush.msra.mxu0 0.0
    %524 = vmatpush.msra.mxu0 0.0
    %525 = vmatpush.msra.mxu0 0.0
    %526 = vmatpush.msra.mxu0 0.0
    %527 = vmatpush.msra.mxu0 0.0
    %528 = vmatpush.msra.mxu0 0.0
    %529 = vmatpush.msra.mxu0 0.0
    %530 = vmatpush.msra.mxu0 0.0
    %531 = vmatpush.msra.mxu0 0.0
    %532 = vmatpush.msra.mxu0 0.0
    %533 = vmatpush.msra.mxu0 0.0
    %534 = vmatpush.msra.mxu0 0.0
    %535 = vmatpush.msra.mxu0 %v39
    %536 = vmatpush.msra.mxu0 %v38
    %537 = vmatpush.msra.mxu0 %v37
    %538 = vmatpush.msra.mxu0 %v36
    %539 = vmatmul.f32.gmra.mxu0 %v521
    %v540 = vpop.f32.mrf.mxu0
    %v541 = vadd.f32 0.0, %v540
    %542 = vdwg.mxu0
    %s543 = scalar_lea.vmem %s5, 12
    %544 = vst.msk [vmem:[%s543] sm:$0x3] %vm117, %v541
    %s545 = scalar_lea.vmem %s0, 14
    %v546 = vld [vmem:[%s545] sm:$0x3]
    %v548 = vsel %vm45, %v546, 0
    %550 = vmatpush.msra.mxu0 0.0
    %551 = vmatpush.msra.mxu0 0.0
    %552 = vmatpush.msra.mxu0 0.0
    %553 = vmatpush.msra.mxu0 0.0
    %554 = vmatpush.msra.mxu0 0.0
    %555 = vmatpush.msra.mxu0 0.0
    %556 = vmatpush.msra.mxu0 0.0
    %557 = vmatpush.msra.mxu0 0.0
    %558 = vmatpush.msra.mxu0 0.0
    %559 = vmatpush.msra.mxu0 0.0
    %560 = vmatpush.msra.mxu0 0.0
    %561 = vmatpush.msra.mxu0 0.0
    %562 = vmatpush.msra.mxu0 0.0
    %563 = vmatpush.msra.mxu0 0.0
    %564 = vmatpush.msra.mxu0 %v30
    %565 = vmatpush.msra.mxu0 %v29
    %566 = vmatmul.f32.gmra.mxu0 %v548
    %v567 = vpop.f32.mrf.mxu0
    %v568 = vadd.f32 %v43, %v567
    %569 = vdwg.mxu0
    %570 = vmatpush.msra.mxu0 0.0
    %571 = vmatpush.msra.mxu0 0.0
    %572 = vmatpush.msra.mxu0 0.0
    %573 = vmatpush.msra.mxu0 0.0
    %574 = vmatpush.msra.mxu0 0.0
    %575 = vmatpush.msra.mxu0 0.0
    %576 = vmatpush.msra.mxu0 0.0
    %577 = vmatpush.msra.mxu0 0.0
    %578 = vmatpush.msra.mxu0 0.0
    %579 = vmatpush.msra.mxu0 0.0
    %580 = vmatpush.msra.mxu0 0.0
    %581 = vmatpush.msra.mxu0 0.0
    %582 = vmatpush.msra.mxu0 %v35
    %583 = vmatpush.msra.mxu0 %v34
    %584 = vmatpush.msra.mxu0 %v33
    %585 = vmatpush.msra.mxu0 %v32
    %586 = vmatmul.f32.gmra.mxu0 %v521
    %v587 = vpop.f32.mrf.mxu0
    %v588 = vadd.f32 %v568, %v587
    %589 = vdwg.mxu0
    %v590 = vtanh.pop %v588
    %v592 = vsel %vm69, %v590, 0
    %594 = vmatpush.msra.mxu0 0.0
    %595 = vmatpush.msra.mxu0 0.0
    %596 = vmatpush.msra.mxu0 0.0
    %597 = vmatpush.msra.mxu0 0.0
    %598 = vmatpush.msra.mxu0 0.0
    %599 = vmatpush.msra.mxu0 0.0
    %600 = vmatpush.msra.mxu0 0.0
    %601 = vmatpush.msra.mxu0 0.0
    %602 = vmatpush.msra.mxu0 0.0
    %603 = vmatpush.msra.mxu0 0.0
    %604 = vmatpush.msra.mxu0 0.0
    %605 = vmatpush.msra.mxu0 0.0
    %606 = vmatpush.msra.mxu0 %v39
    %607 = vmatpush.msra.mxu0 %v38
    %608 = vmatpush.msra.mxu0 %v37
    %609 = vmatpush.msra.mxu0 %v36
    %610 = vmatmul.f32.gmra.mxu0 %v592
    %v611 = vpop.f32.mrf.mxu0
    %v612 = vadd.f32 0.0, %v611
    %613 = vdwg.mxu0
    %s614 = scalar_lea.vmem %s5, 14
    %615 = vst.msk [vmem:[%s614] sm:$0x3] %vm117, %v612
    %vm616 = vcmask 254976
    %617 = vst.msk [vmem:[#allocation2] sm:$0x3] %vm616, %v590
    %618 = vst.msk [vmem:[#allocation3] sm:$0x3] %vm616, %v590
    // Predicated region
    $region26: #{rnn_forward.1} parent=1 // pred_check
      _
    $region27: #{rnn_forward.1} parent=1 // pred_check_branch
      %620 = sbr.rel (0) target = $region29
    $region28: #{rnn_forward.1} parent=1 // pred_region
      _
    $region29: #{rnn_forward.1} parent=1 // pred_fallthru
      _
    // Predicated region
    $region30: #{rnn_forward.1} parent=1 // pred_check
      _
    $region31: #{rnn_forward.1} parent=1 // pred_check_branch
      %622 = sbr.rel (0) target = $region33
    $region32: #{rnn_forward.1} parent=1 // pred_region
      %624 = vsyncadd [#allocation4], 0
      %s626 = sshll.u32 [#allocation3], 4
      %s627 = int_to_ptr.vmem [resolvable:$true] %s626
      %s628 = sshll.u32 %s6, 4
      %s629 = int_to_ptr.hbm [resolvable:$true] %s628
      %631 = dma.vmem_to_hbm [thread:$0]  %s627, 32, %s629, [#allocation4]
    $region33: #{rnn_forward.1} parent=1 // pred_fallthru
      _
    // Predicated region
    $region34: #{rnn_forward.1} parent=1 // pred_check
      _
    $region35: #{rnn_forward.1} parent=1 // pred_check_branch
      %633 = sbr.rel (0) target = $region37
    $region36: #{rnn_forward.1} parent=1 // pred_region
      _
    $region37: #{rnn_forward.1} parent=1 // pred_fallthru
      _
    // Predicated region
    $region38: #{rnn_forward.1} parent=1 // pred_check
      _
    $region39: #{rnn_forward.1} parent=1 // pred_check_branch
      %635 = sbr.rel (0) target = $region41
    $region40: #{rnn_forward.1} parent=1 // pred_region
      %637 = dma.done [#allocation4], 32
    $region41: #{rnn_forward.1} parent=1 // pred_fallthru
      _
    %638 = vsyncpa [#allocation4], 1

</llo_original>
